<compile_context>
chip_gen: v7x
topology: tpu7x:2x2x1
jax: 0.10.0
libtpu: 0.0.40
codegen_flags: <defaults>
</compile_context>

<pallas_src>
import math

import jax
import jax.numpy as jnp
import numpy as np
from jax.experimental import pallas as pl
from jax.experimental.pallas import tpu as pltpu


def _vmem_capacity_bytes() -> int:
    """Best-effort VMEM capacity query; conservative v7x fallback (64 MiB)."""
    try:
        cap = getattr(pltpu.get_tpu_info(), "vmem_capacity_bytes", None)
        if cap:
            return int(cap)
    except Exception:
        pass
    return 64 * 1024 * 1024


def _pick_lane_width(L: int, head_dim: int) -> int:
    """Lane width C of the flattened layout.

    C must be even and divide L = S*head_dim so that (a) rows are lane-dense and
    (b) an even/odd channel pair never straddles a row (rows start at even flat
    offsets).  Prefer multiples of 128 (unmasked vld/vst)."""
    divs = [c for c in range(128, min(L, 4096) + 1, 128) if L % c == 0]
    if divs:
        small = [c for c in divs if c <= 512]
        return max(small) if small else min(divs)
    # Fallback for awkward L: each row holds whole positions (C = m * head_dim).
    S = L // head_dim
    m = max(d for d in range(1, S + 1) if S % d == 0 and d * head_dim <= 2048)
    return m * head_dim


def _pick_block_rows(M, C, x_bytes, tab_bytes, batch, vmem_budget, target_x_block):
    """Rows per block along the flattened (head, row) axis of length M.

    Block rows must be a multiple of 8 (full sublanes) or the full axis.  The
    budget accounts for the real footprint: double-buffered x + out + 3 tables."""
    def footprint(r):
        return r * C * (4 * x_bytes + 6 * tab_bytes)

    divs = [r for r in range(8, M, 8) if M % r == 0] + [M]
    ok = [r for r in divs
          if footprint(r) <= vmem_budget and r * C * x_bytes <= target_x_block]
    r = max(ok) if ok else min(divs)
    # v7x has two TensorCores sharing the chip: make sure the (parallel) grid has
    # at least 2 steps when the batch alone does not provide them.
    if batch * (M // r) < 2:
        smaller = [d for d in divs if d < r]
        if smaller:
            r = max(smaller)
    return r


def _axial_rope_kernel(x_ref, cos_ref, sa_ref, sb_ref, o_ref):
    # x_ref:   (1, R, C)  input rows in their original dtype (lane-dense, C even)
    # cos_ref: (R, C)     cos(freq) repeated per channel pair (1.0 at pass-through)
    # sa_ref:  (R, C)     +sin(freq) at even in-row positions, 0 elsewhere
    # sb_ref:  (R, C)     -sin(freq) at odd  in-row positions, 0 elsewhere
    #
    # out[j] = x[j]*cos[j] + (x*sa)[j-1] + (x*sb)[j+1]
    #   even channel 2i:   x[2i]*c_i - x[2i+1]*s_i
    #   odd  channel 2i+1: x[2i+1]*c_i + x[2i]*s_i
    #   pass-through:      x[j]                      (cos=1, sa=sb=0)
    # The per-row roll wraparound contributes exactly 0: sa is zero at the last
    # (odd) lane of every row and sb is zero at lane 0 (even) of every row.
    C = x_ref.shape[-1]
    x = x_ref[0].astype(jnp.float32)
    y = x * cos_ref[...].astype(jnp.float32)
    y = y + pltpu.roll(x * sa_ref[...].astype(jnp.float32), 1, 1)      # j-1 -> j
    y = y + pltpu.roll(x * sb_ref[...].astype(jnp.float32), C - 1, 1)  # j+1 -> j
    o_ref[0] = y.astype(o_ref.dtype)


def axial_rope_pallas(x, pos, log_freqs_h, log_freqs_w, start_index=0):
    """Forward pass of AxialRoPE.

    x:   (B, n_heads, S, head_dim)   S = flattened H*W spatial positions
    pos: (S, 2)   pos[:, 0] = vertical coord, pos[:, 1] = horizontal coord
    log_freqs_h, log_freqs_w: (n_heads, head_dim // 4)
    """
    B, H, S, head_dim = x.shape
    Hf, d4 = log_freqs_h.shape
    assert Hf == H and log_freqs_w.shape == (H, d4)
    assert pos.shape == (S, 2)
    rot_dim = 4 * d4
    end = start_index + rot_dim
    assert end <= head_dim
    # Channel-pair parity must survive flattening of (S, head_dim).
    assert head_dim % 2 == 0 and start_index % 2 == 0

    f32 = jnp.float32

    # ---- batch-invariant trig tables (tiny compared with x) ------------------
    fh = pos[:, 0].astype(f32)[:, None, None] * jnp.exp(log_freqs_h.astype(f32))
    fw = pos[:, 1].astype(f32)[:, None, None] * jnp.exp(log_freqs_w.astype(f32))
    f = jnp.transpose(jnp.concatenate([fh, fw], axis=-1), (1, 0, 2))   # (H, S, 2*d4)
    c = jnp.cos(f)
    s = jnp.sin(f)
    z = jnp.zeros_like(s)
    cos_rot = jnp.repeat(c, 2, axis=-1)                                # [c0,c0,c1,c1,..]
    sa_rot = jnp.stack([s, z], axis=-1).reshape(H, S, rot_dim)         # [s0, 0,s1, 0,..]
    sb_rot = jnp.stack([z, -s], axis=-1).reshape(H, S, rot_dim)        # [ 0,-s0, 0,-s1,..]
    if start_index > 0 or end < head_dim:
        pad = ((0, 0), (0, 0), (start_index, head_dim - end))
        cos_rot = jnp.pad(cos_rot, pad, constant_values=1.0)           # pass-through: x*1
        sa_rot = jnp.pad(sa_rot, pad)
        sb_rot = jnp.pad(sb_rot, pad)

    # ---- lane-dense flattened layout: (B, H, S, head_dim) -> (B, M, C) -------
    L = S * head_dim
    C = _pick_lane_width(L, head_dim)
    M = H * (L // C)
    tab_dtype = x.dtype                       # bf16 inputs -> bf16 tables (1/2 HBM)
    tab_bytes = jnp.dtype(tab_dtype).itemsize
    cos_t = cos_rot.reshape(M, C).astype(tab_dtype)
    sa_t = sa_rot.reshape(M, C).astype(tab_dtype)
    sb_t = sb_rot.reshape(M, C).astype(tab_dtype)
    x_flat = x.reshape(B, M, C)               # free, layout-preserving reshape

    # ---- block sizing against the real (double-buffered) VMEM footprint ------
    x_bytes = x.dtype.itemsize
    vmem_cap = _vmem_capacity_bytes()
    vmem_budget = int(vmem_cap * 0.7)
    target_x_block = (4 << 20) if vmem_cap <= (64 << 20) else (8 << 20)
    R = _pick_block_rows(M, C, x_bytes, tab_bytes, B, vmem_budget, target_x_block)
    n_t = M // R
    footprint = R * C * (4 * x_bytes + 6 * tab_bytes)
    vmem_limit = int(min(vmem_cap - (2 << 20),
                         max(32 << 20, footprint + (8 << 20))))

    x_spec = pl.BlockSpec((1, R, C), lambda t, b: (b, t, 0))
    tab_spec = pl.BlockSpec((R, C), lambda t, b: (t, 0))   # constant across inner b

    out_flat = pl.pallas_call(
        _axial_rope_kernel,
        out_shape=jax.ShapeDtypeStruct((B, M, C), x.dtype),
        grid=(n_t, B),                  # batch innermost: table blocks stay resident
        in_specs=[x_spec, tab_spec, tab_spec, tab_spec],
        out_specs=x_spec,
        compiler_params=pltpu.CompilerParams(
            dimension_semantics=("parallel", "parallel"),
            vmem_limit_bytes=vmem_limit),
    )(x_flat, cos_t, sa_t, sb_t)

    return out_flat.reshape(B, H, S, head_dim)


# ---------------- pure-JAX reference (mirrors the PyTorch code) ----------------
def _rotate_half_ref(x):
    x1 = x[..., 0::2]
    x2 = x[..., 1::2]
    st = jnp.stack([-x2, x1], axis=-1)
    return st.reshape(*x.shape[:-1], -1)


def axial_rope_ref(x, pos, log_freqs_h, log_freqs_w, start_index=0):
    fh = pos[..., None, None, 0] * jnp.exp(log_freqs_h)
    fw = pos[..., None, None, 1] * jnp.exp(log_freqs_w)
    freqs = jnp.concatenate([fh, fw], axis=-1)
    freqs = jnp.repeat(freqs, 2, axis=-1)          # repeat_interleave(2, dim=-1)
    freqs = jnp.swapaxes(freqs, -2, -3)            # transpose(-2, -3)
    rot_dim = freqs.shape[-1]
    end = start_index + rot_dim
    t_left = x[..., :start_index]
    t = x[..., start_index:end]
    t_right = x[..., end:]
    freqs = freqs.astype(t.dtype)
    t = t * jnp.cos(freqs) + _rotate_half_ref(t) * jnp.sin(freqs)
    return jnp.concatenate([t_left, t, t_right], axis=-1)


if __name__ == "__main__":
    key = jax.random.PRNGKey(0)

    # ---- test 1: start_index == 0 (rot_dim == head_dim), float32 -------------
    B, n_heads, dim = 2, 4, 32
    Hs = Ws = 16
    S = Hs * Ws
    d4 = dim // 4

    k1, k2 = jax.random.split(key)
    x = jax.random.normal(k1, (B, n_heads, S, dim), dtype=jnp.float32)

    ys = jnp.linspace(-1.0, 1.0, Hs)
    xs = jnp.linspace(-1.0, 1.0, Ws)
    pos = jnp.stack(jnp.meshgrid(ys, xs, indexing="ij"), axis=-1).reshape(S, 2)

    # deterministic parameter init: freqs_pixel_log(max_freq=10.0)
    base = jnp.linspace(math.log(math.pi), math.log(10.0 * math.pi / 2.0), d4,
                        dtype=jnp.float32)
    log_freqs_h = jnp.broadcast_to(base, (n_heads, d4))
    log_freqs_w = jnp.broadcast_to(base, (n_heads, d4))

    out = axial_rope_pallas(x, pos, log_freqs_h, log_freqs_w, start_index=0)
    out = jax.block_until_ready(out)
    ref = axial_rope_ref(x, pos, log_freqs_h, log_freqs_w, start_index=0)
    np.testing.assert_allclose(np.asarray(out), np.asarray(ref), rtol=1e-4, atol=1e-4)

    # ---- test 1b: bfloat16 I/O (bf16-stored x and tables, f32 math) ----------
    xb = x.astype(jnp.bfloat16)
    outb = axial_rope_pallas(xb, pos, log_freqs_h, log_freqs_w, start_index=0)
    outb = jax.block_until_ready(outb)
    assert outb.dtype == jnp.bfloat16
    refb = axial_rope_ref(xb.astype(jnp.float32), pos, log_freqs_h, log_freqs_w)
    np.testing.assert_allclose(np.asarray(outb.astype(jnp.float32)),
                               np.asarray(refb), rtol=5e-2, atol=1e-1)

    # ---- test 2: pass-through channels (start_index > 0) ---------------------
    B2, H2, dim2, start2 = 1, 2, 34, 2
    Hs2 = Ws2 = 8
    S2 = Hs2 * Ws2
    d42 = dim2 // 4            # = 8 -> rot_dim = 32, end = 34 == dim2
    k3, _ = jax.random.split(k2)
    x2 = jax.random.normal(k3, (B2, H2, S2, dim2), dtype=jnp.float32)
    ys2 = jnp.linspace(-1.0, 1.0, Hs2)
    xs2 = jnp.linspace(-1.0, 1.0, Ws2)
    pos2 = jnp.stack(jnp.meshgrid(ys2, xs2, indexing="ij"), axis=-1).reshape(S2, 2)
    base2 = jnp.linspace(math.log(math.pi), math.log(10.0 * math.pi / 2.0), d42,
                         dtype=jnp.float32)
    lfh2 = jnp.broadcast_to(base2, (H2, d42))
    lfw2 = jnp.broadcast_to(base2, (H2, d42)) * 0.9
    out2 = axial_rope_pallas(x2, pos2, lfh2, lfw2, start_index=start2)
    out2 = jax.block_until_ready(out2)
    ref2 = axial_rope_ref(x2, pos2, lfh2, lfw2, start_index=start2)
    np.testing.assert_allclose(np.asarray(out2), np.asarray(ref2), rtol=1e-4, atol=1e-4)

    print("KERNEL_OK")
</pallas_src>

<mosaic_0001>
module attributes {stable_mosaic.version = 11 : i64} {
  func.func @_axial_rope_kernel(%arg0: i32, %arg1: i32, %arg2: memref<1x64x512xf32, #tpu.memory_space<vmem>>, %arg3: memref<64x512xf32, #tpu.memory_space<vmem>>, %arg4: memref<64x512xf32, #tpu.memory_space<vmem>>, %arg5: memref<64x512xf32, #tpu.memory_space<vmem>>, %arg6: memref<1x64x512xf32, #tpu.memory_space<vmem>>) attributes {dimension_semantics = [#tpu.dimension_semantics<parallel>, #tpu.dimension_semantics<parallel>], iteration_bounds = array<i64: 1, 2>, scalar_prefetch = 0 : i64, scratch_operands = 0 : i64, tpu.core_type = #tpu.core_type<tc>, window_params = [{transform_indices = @transform_0, window_bounds = array<i64: 1, 64, 512>}, {transform_indices = @transform_1, window_bounds = array<i64: 64, 512>}, {transform_indices = @transform_2, window_bounds = array<i64: 64, 512>}, {transform_indices = @transform_3, window_bounds = array<i64: 64, 512>}, {transform_indices = @transform_4, window_bounds = array<i64: 1, 64, 512>}]} {
    %c0 = arith.constant 0 : index
    %c0_0 = arith.constant 0 : index
    %c0_1 = arith.constant 0 : index
    %0 = vector.load %arg2[%c0, %c0_0, %c0_1] : memref<1x64x512xf32, #tpu.memory_space<vmem>>, vector<1x64x512xf32>
    %1 = vector.shape_cast %0 : vector<1x64x512xf32> to vector<64x512xf32>
    %c0_2 = arith.constant 0 : index
    %c0_3 = arith.constant 0 : index
    %2 = vector.load %arg3[%c0_2, %c0_3] : memref<64x512xf32, #tpu.memory_space<vmem>>, vector<64x512xf32>
    %3 = arith.mulf %1, %2 : vector<64x512xf32>
    %c0_4 = arith.constant 0 : index
    %c0_5 = arith.constant 0 : index
    %4 = vector.load %arg4[%c0_4, %c0_5] : memref<64x512xf32, #tpu.memory_space<vmem>>, vector<64x512xf32>
    %5 = arith.mulf %1, %4 : vector<64x512xf32>
    %c1_i32 = arith.constant 1 : i32
    %6 = tpu.dynamic_rotate %5 by %c1_i32 dim 1 : vector<64x512xf32>, i32 -> vector<64x512xf32>
    %7 = arith.addf %3, %6 : vector<64x512xf32>
    %c0_6 = arith.constant 0 : index
    %c0_7 = arith.constant 0 : index
    %8 = vector.load %arg5[%c0_6, %c0_7] : memref<64x512xf32, #tpu.memory_space<vmem>>, vector<64x512xf32>
    %9 = arith.mulf %1, %8 : vector<64x512xf32>
    %c511_i32 = arith.constant 511 : i32
    %10 = tpu.dynamic_rotate %9 by %c511_i32 dim 1 : vector<64x512xf32>, i32 -> vector<64x512xf32>
    %11 = arith.addf %7, %10 : vector<64x512xf32>
    %c0_8 = arith.constant 0 : index
    %c0_9 = arith.constant 0 : index
    %c0_10 = arith.constant 0 : index
    %12 = vector.load %arg6[%c0_8, %c0_9, %c0_10] : memref<1x64x512xf32, #tpu.memory_space<vmem>>, vector<1x64x512xf32>
    %13 = vector.shape_cast %12 : vector<1x64x512xf32> to vector<64x512xf32>
    %14 = vector.shape_cast %11 : vector<64x512xf32> to vector<1x64x512xf32>
    tpu.vector_store %arg6[%c0_8, %c0_9, %c0_10], %14 {strides = array<i32>} : memref<1x64x512xf32, #tpu.memory_space<vmem>>, vector<1x64x512xf32>,
    return
  }
  func.func @transform_0(%arg0: i32, %arg1: i32) -> (i32, i32, i32) {
    %c0_i32 = arith.constant 0 : i32
    %c0_i32_0 = arith.constant 0 : i32
    return %arg1, %arg0, %c0_i32 : i32, i32, i32
  }
  func.func @transform_1(%arg0: i32, %arg1: i32) -> (i32, i32) {
    %c0_i32 = arith.constant 0 : i32
    %c0_i32_0 = arith.constant 0 : i32
    return %arg0, %c0_i32 : i32, i32
  }
  func.func @transform_2(%arg0: i32, %arg1: i32) -> (i32, i32) {
    %c0_i32 = arith.constant 0 : i32
    %c0_i32_0 = arith.constant 0 : i32
    return %arg0, %c0_i32 : i32, i32
  }
  func.func @transform_3(%arg0: i32, %arg1: i32) -> (i32, i32) {
    %c0_i32 = arith.constant 0 : i32
    %c0_i32_0 = arith.constant 0 : i32
    return %arg0, %c0_i32 : i32, i32
  }
  func.func @transform_4(%arg0: i32, %arg1: i32) -> (i32, i32, i32) {
    %c0_i32 = arith.constant 0 : i32
    %c0_i32_0 = arith.constant 0 : i32
    return %arg1, %arg0, %c0_i32 : i32, i32, i32
  }
}

</mosaic_0001>

<llo_original>
// kernel: tpu_custom_call.1
$region0: #{tpu_custom_call.1}
  #allocation0 [shape = 'u32[]', space=smem, size = 0x4, offset = 0x4, fixed_abs, tag = 'smem constant byte address 0x4 - core index']
  #allocation1 [shape = 'u32[144,128]{1,0:T(1,128)}', space=vmem, size = 0x12000, scoped, tag = 'internal scratch']
  %s0 = inlined_call_operand.hbm [shape: f32[2,64,512], index: 0, kind: input, shape index: {}]
  %s1 = inlined_call_operand.hbm [shape: f32[64,512], index: 1, kind: input, shape index: {}]
  %s2 = inlined_call_operand.hbm [shape: f32[64,512], index: 2, kind: input, shape index: {}]
  %s3 = inlined_call_operand.hbm [shape: f32[64,512], index: 3, kind: input, shape index: {}]
  %s4 = inlined_call_operand.hbm [shape: f32[2,64,512], index: 4, kind: output, shape index: {}]
  %s5 = sld [smem:[#allocation0]]
  $region65: #{tpu_custom_call.1} parent=0
    _
  %s7 = ssub.s32 1, %s5
  %s8 = scalar_select 0, %s7, %s5
  $region1: #{tpu_custom_call.1} parent=0
    #allocation2 [shape = 'u8[262144]{0}', space=vmem, size = 0x40000, scoped, tag = 'input window, operand 0']
    #allocation3 [shape = 's32[2]{0}', space=sflag, size = 0x8, scoped, tag = 'scoped memory for tpu_custom_call.1']
    #allocation4 [shape = 's32[2]{0}', space=sflag, size = 0x8, scoped, tag = 'scoped memory for tpu_custom_call.1']
    #allocation5 [shape = 'u8[131072]{0}', space=vmem, size = 0x20000, scoped, tag = 'input window, operand 1, single buffered']
    #allocation6 [shape = 's32[1]{0}', space=sflag, size = 0x4, scoped, tag = 'scoped memory for tpu_custom_call.1']
    #allocation7 [shape = 'u8[131072]{0}', space=vmem, size = 0x20000, scoped, tag = 'input window, operand 2, single buffered']
    #allocation8 [shape = 'u8[131072]{0}', space=vmem, size = 0x20000, scoped, tag = 'input window, operand 3, single buffered']
    #allocation9 [shape = 's32[1]{0}', space=sflag, size = 0x4, scoped, tag = 'scoped memory for tpu_custom_call.1']
    #allocation10 [shape = 'u8[262144]{0}', space=vmem, size = 0x40000, scoped, tag = 'output window, operand 0']
    %9 = vsyncpa [#allocation3], 0
    %s10 = scalar_lea.sflag [#allocation3], 1
    %11 = vsyncpa %s10, 0
    %12 = vsyncpa [#allocation6], 0
    %13 = vsyncpa [#allocation9], 0
    %14 = vsyncpa [#allocation4], 0
    %s15 = scalar_lea.sflag [#allocation4], 1
    %16 = vsyncpa %s15, 0
    loop: start=0, step=1, limit=4
    $region2: #{tpu_custom_call.1} parent=1 // loop_pre_header
      _
    $region3: #{tpu_custom_call.1} parent=1 // loop_header
      %s18 = sphi 0, %s22
      %p19 = scmp.ge.s32.totalorder %s18, 4
      %s25 = sphi 0, %s37
      %s26 = sphi 0, %s33
      %s27 = sphi 0, %s25
      %s28 = sphi 0, %s26
      %s29 = sphi 0, %s27
      %s30 = sphi 0, %s28
      %s42 = sphi 0, %s44
      %s45 = sphi 0, %s42
      %s46 = sphi 0, %s45
      %s62 = sphi 0, %s46
      %s68 = sphi 0, %s70
      %s71 = sphi 0, %s68
      %s72 = sphi 0, %s71
      %s88 = sphi 0, %s72
      %s94 = sphi 0, %s96
      %s97 = sphi 0, %s94
      %s98 = sphi 0, %s97
      %s114 = sphi 0, %s98
      %s120 = sphi 0, %s122
      %s123 = sphi 0, %s120
      %s124 = sphi 0, %s123
      %s140 = sphi 0, %s124
      %s148 = sphi 0, %s150
      %s151 = sphi 0, %s148
      %s152 = sphi 0, %s151
      %s168 = sphi 0, %s152
    $region4: #{tpu_custom_call.1} parent=1 // loop_header_branch
      %21 = sbr.rel (%p19) target = $region8
    $region5: #{tpu_custom_call.1} parent=1 // loop_body
      %s23 = ssub.s32 %s18, 1
      %s24 = ssub.s32 %s18, 2
      %s31 = sadd.s32 1, %s26
      %p32 = scmp.ge.s32.totalorder %s31, 2
      %s33 = scalar_select %p32, 0, %s31
      %s34 = sadd.s32 1, %s25
      %s35 = scalar_select %p32, %s34, %s25
      %p36 = scmp.ge.s32.totalorder %s35, 1
      %s37 = scalar_select %p36, 0, %s35
      %s38 = ssub.s32 %s26, %s33
      %s39 = ssub.s32 %s25, %s37
      %s40 = sor.u32 %s38, %s39
      %p41 = scmp.eq.s32.totalorder %s40, 0
      %s43 = sadd.s32 %s42, 1
      %s44 = scalar_select %p41, %s42, %s43
      %p47 = pneg %p41
      %p48 = scmp.eq.s32.totalorder %s18, 1
      %p49 = por %p47, %p48
      %p50 = scmp.ne.s32.totalorder %s42, %s45
      %p51 = scmp.eq.s32.totalorder %s18, 0
      %p52 = por %p50, %p51
      %p53 = scmp.ne.s32.totalorder %s42, %s45
      %p54 = scmp.eq.s32.totalorder %s23, 1
      %p55 = por %p53, %p54
      %p56 = scmp.ne.s32.totalorder %s45, %s46
      %p57 = scmp.eq.s32.totalorder %s23, 0
      %p58 = por %p56, %p57
      %p59 = scmp.ne.s32.totalorder %s45, %s46
      %p60 = scmp.eq.s32.totalorder %s24, 1
      %p61 = por %p59, %p60
      %p63 = scmp.ne.s32.totalorder %s46, %s62
      %p64 = scmp.eq.s32.totalorder %s24, 0
      %p65 = por %p63, %p64
      %s66 = ssub.s32 %s25, %s37
      %p67 = scmp.eq.s32.totalorder %s66, 0
      %s69 = sadd.s32 %s68, 1
      %s70 = scalar_select %p67, %s68, %s69
      %p73 = pneg %p67
      %p74 = scmp.eq.s32.totalorder %s18, 1
      %p75 = por %p73, %p74
      %p76 = scmp.ne.s32.totalorder %s68, %s71
      %p77 = scmp.eq.s32.totalorder %s18, 0
      %p78 = por %p76, %p77
      %p79 = scmp.ne.s32.totalorder %s68, %s71
      %p80 = scmp.eq.s32.totalorder %s23, 1
      %p81 = por %p79, %p80
      %p82 = scmp.ne.s32.totalorder %s71, %s72
      %p83 = scmp.eq.s32.totalorder %s23, 0
      %p84 = por %p82, %p83
      %p85 = scmp.ne.s32.totalorder %s71, %s72
      %p86 = scmp.eq.s32.totalorder %s24, 1
      %p87 = por %p85, %p86
      %p89 = scmp.ne.s32.totalorder %s72, %s88
      %p90 = scmp.eq.s32.totalorder %s24, 0
      %p91 = por %p89, %p90
      %s92 = ssub.s32 %s25, %s37
      %p93 = scmp.eq.s32.totalorder %s92, 0
      %s95 = sadd.s32 %s94, 1
      %s96 = scalar_select %p93, %s94, %s95
      %p99 = pneg %p93
      %p100 = scmp.eq.s32.totalorder %s18, 1
      %p101 = por %p99, %p100
      %p102 = scmp.ne.s32.totalorder %s94, %s97
      %p103 = scmp.eq.s32.totalorder %s18, 0
      %p104 = por %p102, %p103
      %p105 = scmp.ne.s32.totalorder %s94, %s97
      %p106 = scmp.eq.s32.totalorder %s23, 1
      %p107 = por %p105, %p106
      %p108 = scmp.ne.s32.totalorder %s97, %s98
      %p109 = scmp.eq.s32.totalorder %s23, 0
      %p110 = por %p108, %p109
      %p111 = scmp.ne.s32.totalorder %s97, %s98
      %p112 = scmp.eq.s32.totalorder %s24, 1
      %p113 = por %p111, %p112
      %p115 = scmp.ne.s32.totalorder %s98, %s114
      %p116 = scmp.eq.s32.totalorder %s24, 0
      %p117 = por %p115, %p116
      %s118 = ssub.s32 %s25, %s37
      %p119 = scmp.eq.s32.totalorder %s118, 0
      %s121 = sadd.s32 %s120, 1
      %s122 = scalar_select %p119, %s120, %s121
      %p125 = pneg %p119
      %p126 = scmp.eq.s32.totalorder %s18, 1
      %p127 = por %p125, %p126
      %p128 = scmp.ne.s32.totalorder %s120, %s123
      %p129 = scmp.eq.s32.totalorder %s18, 0
      %p130 = por %p128, %p129
      %p131 = scmp.ne.s32.totalorder %s120, %s123
      %p132 = scmp.eq.s32.totalorder %s23, 1
      %p133 = por %p131, %p132
      %p134 = scmp.ne.s32.totalorder %s123, %s124
      %p135 = scmp.eq.s32.totalorder %s23, 0
      %p136 = por %p134, %p135
      %p137 = scmp.ne.s32.totalorder %s123, %s124
      %p138 = scmp.eq.s32.totalorder %s24, 1
      %p139 = por %p137, %p138
      %p141 = scmp.ne.s32.totalorder %s124, %s140
      %p142 = scmp.eq.s32.totalorder %s24, 0
      %p143 = por %p141, %p142
      %s144 = ssub.s32 %s26, %s33
      %s145 = ssub.s32 %s25, %s37
      %s146 = sor.u32 %s144, %s145
      %p147 = scmp.eq.s32.totalorder %s146, 0
      %s149 = sadd.s32 %s148, 1
      %s150 = scalar_select %p147, %s148, %s149
      %p153 = pneg %p147
      %p154 = scmp.eq.s32.totalorder %s18, 1
      %p155 = por %p153, %p154
      %p156 = scmp.ne.s32.totalorder %s148, %s151
      %p157 = scmp.eq.s32.totalorder %s18, 0
      %p158 = por %p156, %p157
      %p159 = scmp.ne.s32.totalorder %s148, %s151
      %p160 = scmp.eq.s32.totalorder %s23, 1
      %p161 = por %p159, %p160
      %p162 = scmp.ne.s32.totalorder %s151, %s152
      %p163 = scmp.eq.s32.totalorder %s23, 0
      %p164 = por %p162, %p163
      %p165 = scmp.ne.s32.totalorder %s151, %s152
      %p166 = scmp.eq.s32.totalorder %s24, 1
      %p167 = por %p165, %p166
      %p169 = scmp.ne.s32.totalorder %s152, %s168
      %p170 = scmp.eq.s32.totalorder %s24, 0
      %p171 = por %p169, %p170
      %p172 = scmp.le.s32.totalorder 1, %s18
      %p173 = scmp.lt.s32.totalorder %s18, 3
      %p174 = pnand %p172, %p173
      %p175 = pneg %p174
      // Predicated region
      $region9: #{tpu_custom_call.1} parent=5 // pred_check
        _
      $region10: #{tpu_custom_call.1} parent=5 // pred_check_branch
        %177 = sbr.rel (%p174) target = $region12
      $region11: #{tpu_custom_call.1} parent=5 // pred_region
        %s178 = ssub.s32 %s18, 1
        // Predicated region
        $region13: #{tpu_custom_call.1} parent=11 // pred_check
          %p179 = pneg %p84
        $region14: #{tpu_custom_call.1} parent=11 // pred_check_branch
          %181 = sbr.rel (%p179) target = $region16
        $region15: #{tpu_custom_call.1} parent=11 // pred_region
          %s182 = smul.u32 8, %s27
          %s184 = ssub.s32 4096, 4096
          %185 = vsyncadd [#allocation6], %s184
          %s186 = smul.addr %s182, 4
          %s187 = smul.addr %s186, 128
          %s188 = scalar_lea.hbm %s1, %s187
          %s189 = sshll.u32 [#allocation5], 4
          %s190 = int_to_ptr.vmem [resolvable:$true] %s189
          %195 = dma.hbm_to_vmem [thread:$0]  %s188, 4096, %s190, [#allocation6], 512, 512, 32
        $region16: #{tpu_custom_call.1} parent=11 // pred_fallthru
          _
        // Predicated region
        $region17: #{tpu_custom_call.1} parent=11 // pred_check
          %p196 = pneg %p110
        $region18: #{tpu_custom_call.1} parent=11 // pred_check_branch
          %198 = sbr.rel (%p196) target = $region20
        $region19: #{tpu_custom_call.1} parent=11 // pred_region
          %s199 = smul.u32 8, %s27
          %s201 = ssub.s32 4096, 4096
          %202 = vsyncadd [#allocation6], %s201
          %s203 = smul.addr %s199, 4
          %s204 = smul.addr %s203, 128
          %s205 = scalar_lea.hbm %s2, %s204
          %s206 = sshll.u32 [#allocation7], 4
          %s207 = int_to_ptr.vmem [resolvable:$true] %s206
          %212 = dma.hbm_to_vmem [thread:$0]  %s205, 4096, %s207, [#allocation6], 512, 512, 32
        $region20: #{tpu_custom_call.1} parent=11 // pred_fallthru
          _
        // Predicated region
        $region21: #{tpu_custom_call.1} parent=11 // pred_check
          %p213 = pneg %p136
        $region22: #{tpu_custom_call.1} parent=11 // pred_check_branch
          %215 = sbr.rel (%p213) target = $region24
        $region23: #{tpu_custom_call.1} parent=11 // pred_region
          %s216 = smul.u32 8, %s27
          %s218 = ssub.s32 4096, 4096
          %219 = vsyncadd [#allocation9], %s218
          %s220 = smul.addr %s216, 4
          %s221 = smul.addr %s220, 128
          %s222 = scalar_lea.hbm %s3, %s221
          %s223 = sshll.u32 [#allocation8], 4
          %s224 = int_to_ptr.vmem [resolvable:$true] %s223
          %229 = dma.hbm_to_vmem [thread:$0]  %s222, 4096, %s224, [#allocation9], 512, 512, 32
        $region24: #{tpu_custom_call.1} parent=11 // pred_fallthru
          _
      $region12: #{tpu_custom_call.1} parent=5 // pred_fallthru
        _
      %p230 = scmp.lt.s32.totalorder %s18, 2
      // Predicated region
      $region25: #{tpu_custom_call.1} parent=5 // pred_check
        %p231 = pneg %p230
      $region26: #{tpu_custom_call.1} parent=5 // pred_check_branch
        %233 = sbr.rel (%p231) target = $region28
      $region27: #{tpu_custom_call.1} parent=5 // pred_region
        // Predicated region
        $region29: #{tpu_custom_call.1} parent=27 // pred_check
          %p234 = pneg %p52
        $region30: #{tpu_custom_call.1} parent=27 // pred_check_branch
          %236 = sbr.rel (%p234) target = $region32
        $region31: #{tpu_custom_call.1} parent=27 // pred_region
          %s237 = sand.u32 %s42, 1
          %s238 = scalar_lea.sflag [#allocation3], %s237
          %s239 = sand.u32 %s42, 1
          %s240 = smul.addr %s239, 256
          %s241 = scalar_lea.vmem [#allocation2], %s240
          %s242 = smul.u32 8, %s25
          %s244 = ssub.s32 4096, 4096
          %245 = vsyncadd %s238, %s244
          %s246 = smul.addr %s242, 4
          %s247 = smul.addr %s26, 32
          %s248 = sadd.s32 %s246, %s247
          %s249 = smul.addr %s248, 128
          %s250 = scalar_lea.hbm %s0, %s249
          %s251 = sshll.u32 %s241, 4
          %s252 = int_to_ptr.vmem [resolvable:$true] %s251
          %257 = dma.hbm_to_vmem [thread:$0]  %s250, 4096, %s252, %s238, 512, 512, 32
        $region32: #{tpu_custom_call.1} parent=27 // pred_fallthru
          _
      $region28: #{tpu_custom_call.1} parent=5 // pred_fallthru
        _
      %p258 = scmp.le.s32.totalorder 1, %s18
      %p259 = scmp.lt.s32.totalorder %s18, 3
      %p260 = pnand %p258, %p259
      %p261 = pneg %p260
      // Predicated region
      $region33: #{tpu_custom_call.1} parent=5 // pred_check
        _
      $region34: #{tpu_custom_call.1} parent=5 // pred_check_branch
        %263 = sbr.rel (%p260) target = $region36
      $region35: #{tpu_custom_call.1} parent=5 // pred_region
        %s264 = ssub.s32 %s18, 1
        %s265 = sand.u32 %s45, 1
        %s266 = scalar_lea.sflag [#allocation3], %s265
        %s267 = sand.u32 %s45, 1
        %s268 = smul.addr %s267, 256
        %s269 = scalar_lea.vmem [#allocation2], %s268
        // Predicated region
        $region37: #{tpu_custom_call.1} parent=35 // pred_check
          %p270 = pneg %p58
        $region38: #{tpu_custom_call.1} parent=35 // pred_check_branch
          %272 = sbr.rel (%p270) target = $region40
        $region39: #{tpu_custom_call.1} parent=35 // pred_region
          %273 = dma.done %s266, 4096
        $region40: #{tpu_custom_call.1} parent=35 // pred_fallthru
          _
        // Predicated region
        $region41: #{tpu_custom_call.1} parent=35 // pred_check
          %p274 = pneg %p84
        $region42: #{tpu_custom_call.1} parent=35 // pred_check_branch
          %276 = sbr.rel (%p274) target = $region44
        $region43: #{tpu_custom_call.1} parent=35 // pred_region
          %277 = dma.done [#allocation6], 4096
        $region44: #{tpu_custom_call.1} parent=35 // pred_fallthru
          _
        // Predicated region
        $region45: #{tpu_custom_call.1} parent=35 // pred_check
          %p278 = pneg %p110
        $region46: #{tpu_custom_call.1} parent=35 // pred_check_branch
          %280 = sbr.rel (%p278) target = $region48
        $region47: #{tpu_custom_call.1} parent=35 // pred_region
          %281 = dma.done [#allocation6], 4096
        $region48: #{tpu_custom_call.1} parent=35 // pred_fallthru
          _
        // Predicated region
        $region49: #{tpu_custom_call.1} parent=35 // pred_check
          %p282 = pneg %p136
        $region50: #{tpu_custom_call.1} parent=35 // pred_check_branch
          %284 = sbr.rel (%p282) target = $region52
        $region51: #{tpu_custom_call.1} parent=35 // pred_region
          %285 = dma.done [#allocation9], 4096
        $region52: #{tpu_custom_call.1} parent=35 // pred_fallthru
          _
        %s286 = sand.u32 %s45, 1
        %s287 = scalar_lea.sflag [#allocation3], %s286
        %s288 = sand.u32 %s45, 1
        %s289 = smul.addr %s288, 256
        %s290 = scalar_lea.vmem [#allocation2], %s289
        %p291 = pneg %p58
        %p292 = pneg %p55
        %p293 = pneg %p84
        %p294 = pneg %p81
        %p295 = pneg %p110
        %p296 = pneg %p107
        %p297 = pneg %p136
        %p298 = pneg %p133
        %p299 = pneg %p164
        %p300 = pneg %p161
        %s301 = sand.u32 %s151, 1
        %s302 = scalar_lea.sflag [#allocation4], %s301
        %s303 = sand.u32 %s151, 1
        %s304 = smul.addr %s303, 256
        %s305 = scalar_lea.vmem [#allocation10], %s304
        %s306 = smul.u32 8, %s27
        %s307 = smul.u32 8, %s27
        %s308 = smul.u32 8, %s27
        %s309 = smul.u32 8, %s27
        %s310 = smul.u32 8, %s27
        %v311 = vld [vmem:[%s269] sm:$0xff]
        %v312 = vld [vmem:[%s269 + $0x8] sm:$0xff]
        %v313 = vld [vmem:[%s269 + $0x10] sm:$0xff]
        %v314 = vld [vmem:[%s269 + $0x18] sm:$0xff]
        %v315 = vld [vmem:[%s269 + $0x20] sm:$0xff]
        %v316 = vld [vmem:[%s269 + $0x28] sm:$0xff]
        %v317 = vld [vmem:[%s269 + $0x30] sm:$0xff]
        %v318 = vld [vmem:[%s269 + $0x38] sm:$0xff]
        %v319 = vld [vmem:[%s269 + $0x40] sm:$0xff]
        %v320 = vld [vmem:[%s269 + $0x48] sm:$0xff]
        %v321 = vld [vmem:[%s269 + $0x50] sm:$0xff]
        %v322 = vld [vmem:[%s269 + $0x58] sm:$0xff]
        %v323 = vld [vmem:[%s269 + $0x60] sm:$0xff]
        %v324 = vld [vmem:[%s269 + $0x68] sm:$0xff]
        %v325 = vld [vmem:[%s269 + $0x70] sm:$0xff]
        %v326 = vld [vmem:[%s269 + $0x78] sm:$0xff]
        %v327 = vld [vmem:[%s269 + $0x80] sm:$0xff]
        %v328 = vld [vmem:[%s269 + $0x88] sm:$0xff]
        %v329 = vld [vmem:[%s269 + $0x90] sm:$0xff]
        %v330 = vld [vmem:[%s269 + $0x98] sm:$0xff]
        %v331 = vld [vmem:[%s269 + $0xa0] sm:$0xff]
        %v332 = vld [vmem:[%s269 + $0xa8] sm:$0xff]
        %v333 = vld [vmem:[%s269 + $0xb0] sm:$0xff]
        %v334 = vld [vmem:[%s269 + $0xb8] sm:$0xff]
        %v335 = vld [vmem:[%s269 + $0xc0] sm:$0xff]
        %v336 = vld [vmem:[%s269 + $0xc8] sm:$0xff]
        %v337 = vld [vmem:[%s269 + $0xd0] sm:$0xff]
        %v338 = vld [vmem:[%s269 + $0xd8] sm:$0xff]
        %v339 = vld [vmem:[%s269 + $0xe0] sm:$0xff]
        %v340 = vld [vmem:[%s269 + $0xe8] sm:$0xff]
        %v341 = vld [vmem:[%s269 + $0xf0] sm:$0xff]
        %v342 = vld [vmem:[%s269 + $0xf8] sm:$0xff]
        %v343 = vld [vmem:[#allocation5] sm:$0xff]
        %v344 = vld [vmem:[#allocation5 + $0x8] sm:$0xff]
        %v345 = vld [vmem:[#allocation5 + $0x10] sm:$0xff]
        %v346 = vld [vmem:[#allocation5 + $0x18] sm:$0xff]
        %v347 = vld [vmem:[#allocation5 + $0x20] sm:$0xff]
        %v348 = vld [vmem:[#allocation5 + $0x28] sm:$0xff]
        %v349 = vld [vmem:[#allocation5 + $0x30] sm:$0xff]
        %v350 = vld [vmem:[#allocation5 + $0x38] sm:$0xff]
        %v351 = vld [vmem:[#allocation5 + $0x40] sm:$0xff]
        %v352 = vld [vmem:[#allocation5 + $0x48] sm:$0xff]
        %v353 = vld [vmem:[#allocation5 + $0x50] sm:$0xff]
        %v354 = vld [vmem:[#allocation5 + $0x58] sm:$0xff]
        %v355 = vld [vmem:[#allocation5 + $0x60] sm:$0xff]
        %v356 = vld [vmem:[#allocation5 + $0x68] sm:$0xff]
        %v357 = vld [vmem:[#allocation5 + $0x70] sm:$0xff]
        %v358 = vld [vmem:[#allocation5 + $0x78] sm:$0xff]
        %v359 = vld [vmem:[#allocation5 + $0x80] sm:$0xff]
        %v360 = vld [vmem:[#allocation5 + $0x88] sm:$0xff]
        %v361 = vld [vmem:[#allocation5 + $0x90] sm:$0xff]
        %v362 = vld [vmem:[#allocation5 + $0x98] sm:$0xff]
        %v363 = vld [vmem:[#allocation5 + $0xa0] sm:$0xff]
        %v364 = vld [vmem:[#allocation5 + $0xa8] sm:$0xff]
        %v365 = vld [vmem:[#allocation5 + $0xb0] sm:$0xff]
        %v366 = vld [vmem:[#allocation5 + $0xb8] sm:$0xff]
        %v367 = vld [vmem:[#allocation5 + $0xc0] sm:$0xff]
        %v368 = vld [vmem:[#allocation5 + $0xc8] sm:$0xff]
        %v369 = vld [vmem:[#allocation5 + $0xd0] sm:$0xff]
        %v370 = vld [vmem:[#allocation5 + $0xd8] sm:$0xff]
        %v371 = vld [vmem:[#allocation5 + $0xe0] sm:$0xff]
        %v372 = vld [vmem:[#allocation5 + $0xe8] sm:$0xff]
        %v373 = vld [vmem:[#allocation5 + $0xf0] sm:$0xff]
        %v374 = vld [vmem:[#allocation5 + $0xf8] sm:$0xff]
        %v375 = vmul.f32 %v311, %v343
        %v376 = vmul.f32 %v312, %v344
        %v377 = vmul.f32 %v313, %v345
        %v378 = vmul.f32 %v314, %v346
        %v379 = vmul.f32 %v315, %v347
        %v380 = vmul.f32 %v316, %v348
        %v381 = vmul.f32 %v317, %v349
        %v382 = vmul.f32 %v318, %v350
        %v383 = vmul.f32 %v319, %v351
        %v384 = vmul.f32 %v320, %v352
        %v385 = vmul.f32 %v321, %v353
        %v386 = vmul.f32 %v322, %v354
        %v387 = vmul.f32 %v323, %v355
        %v388 = vmul.f32 %v324, %v356
        %v389 = vmul.f32 %v325, %v357
        %v390 = vmul.f32 %v326, %v358
        %v391 = vmul.f32 %v327, %v359
        %v392 = vmul.f32 %v328, %v360
        %v393 = vmul.f32 %v329, %v361
        %v394 = vmul.f32 %v330, %v362
        %v395 = vmul.f32 %v331, %v363
        %v396 = vmul.f32 %v332, %v364
        %v397 = vmul.f32 %v333, %v365
        %v398 = vmul.f32 %v334, %v366
        %v399 = vmul.f32 %v335, %v367
        %v400 = vmul.f32 %v336, %v368
        %v401 = vmul.f32 %v337, %v369
        %v402 = vmul.f32 %v338, %v370
        %v403 = vmul.f32 %v339, %v371
        %v404 = vmul.f32 %v340, %v372
        %v405 = vmul.f32 %v341, %v373
        %v406 = vmul.f32 %v342, %v374
        %v407 = vld [vmem:[#allocation7] sm:$0xff]
        %v408 = vld [vmem:[#allocation7 + $0x8] sm:$0xff]
        %v409 = vld [vmem:[#allocation7 + $0x10] sm:$0xff]
        %v410 = vld [vmem:[#allocation7 + $0x18] sm:$0xff]
        %v411 = vld [vmem:[#allocation7 + $0x20] sm:$0xff]
        %v412 = vld [vmem:[#allocation7 + $0x28] sm:$0xff]
        %v413 = vld [vmem:[#allocation7 + $0x30] sm:$0xff]
        %v414 = vld [vmem:[#allocation7 + $0x38] sm:$0xff]
        %v415 = vld [vmem:[#allocation7 + $0x40] sm:$0xff]
        %v416 = vld [vmem:[#allocation7 + $0x48] sm:$0xff]
        %v417 = vld [vmem:[#allocation7 + $0x50] sm:$0xff]
        %v418 = vld [vmem:[#allocation7 + $0x58] sm:$0xff]
        %v419 = vld [vmem:[#allocation7 + $0x60] sm:$0xff]
        %v420 = vld [vmem:[#allocation7 + $0x68] sm:$0xff]
        %v421 = vld [vmem:[#allocation7 + $0x70] sm:$0xff]
        %v422 = vld [vmem:[#allocation7 + $0x78] sm:$0xff]
        %v423 = vld [vmem:[#allocation7 + $0x80] sm:$0xff]
        %v424 = vld [vmem:[#allocation7 + $0x88] sm:$0xff]
        %v425 = vld [vmem:[#allocation7 + $0x90] sm:$0xff]
        %v426 = vld [vmem:[#allocation7 + $0x98] sm:$0xff]
        %v427 = vld [vmem:[#allocation7 + $0xa0] sm:$0xff]
        %v428 = vld [vmem:[#allocation7 + $0xa8] sm:$0xff]
        %v429 = vld [vmem:[#allocation7 + $0xb0] sm:$0xff]
        %v430 = vld [vmem:[#allocation7 + $0xb8] sm:$0xff]
        %v431 = vld [vmem:[#allocation7 + $0xc0] sm:$0xff]
        %v432 = vld [vmem:[#allocation7 + $0xc8] sm:$0xff]
        %v433 = vld [vmem:[#allocation7 + $0xd0] sm:$0xff]
        %v434 = vld [vmem:[#allocation7 + $0xd8] sm:$0xff]
        %v435 = vld [vmem:[#allocation7 + $0xe0] sm:$0xff]
        %v436 = vld [vmem:[#allocation7 + $0xe8] sm:$0xff]
        %v437 = vld [vmem:[#allocation7 + $0xf0] sm:$0xff]
        %v438 = vld [vmem:[#allocation7 + $0xf8] sm:$0xff]
        %v439 = vmul.f32 %v311, %v407
        %v440 = vmul.f32 %v312, %v408
        %v441 = vmul.f32 %v313, %v409
        %v442 = vmul.f32 %v314, %v410
        %v443 = vmul.f32 %v315, %v411
        %v444 = vmul.f32 %v316, %v412
        %v445 = vmul.f32 %v317, %v413
        %v446 = vmul.f32 %v318, %v414
        %v447 = vmul.f32 %v319, %v415
        %v448 = vmul.f32 %v320, %v416
        %v449 = vmul.f32 %v321, %v417
        %v450 = vmul.f32 %v322, %v418
        %v451 = vmul.f32 %v323, %v419
        %v452 = vmul.f32 %v324, %v420
        %v453 = vmul.f32 %v325, %v421
        %v454 = vmul.f32 %v326, %v422
        %v455 = vmul.f32 %v327, %v423
        %v456 = vmul.f32 %v328, %v424
        %v457 = vmul.f32 %v329, %v425
        %v458 = vmul.f32 %v330, %v426
        %v459 = vmul.f32 %v331, %v427
        %v460 = vmul.f32 %v332, %v428
        %v461 = vmul.f32 %v333, %v429
        %v462 = vmul.f32 %v334, %v430
        %v463 = vmul.f32 %v335, %v431
        %v464 = vmul.f32 %v336, %v432
        %v465 = vmul.f32 %v337, %v433
        %v466 = vmul.f32 %v338, %v434
        %v467 = vmul.f32 %v339, %v435
        %v468 = vmul.f32 %v340, %v436
        %v469 = vmul.f32 %v341, %v437
        %v470 = vmul.f32 %v342, %v438
        %471 = vrot.lane.b32.xlu0 %v439, 1
        %v472 = vpop.permute.xlu0 %471
        %473 = vrot.lane.b32.xlu0 %v443, 1
        %v474 = vpop.permute.xlu0 %473
        %475 = vrot.lane.b32.xlu0 %v447, 1
        %v476 = vpop.permute.xlu0 %475
        %477 = vrot.lane.b32.xlu0 %v451, 1
        %v478 = vpop.permute.xlu0 %477
        %479 = vrot.lane.b32.xlu0 %v455, 1
        %v480 = vpop.permute.xlu0 %479
        %481 = vrot.lane.b32.xlu0 %v459, 1
        %v482 = vpop.permute.xlu0 %481
        %483 = vrot.lane.b32.xlu0 %v463, 1
        %v484 = vpop.permute.xlu0 %483
        %485 = vrot.lane.b32.xlu0 %v467, 1
        %v486 = vpop.permute.xlu0 %485
        %487 = vrot.lane.b32.xlu0 %v440, 1
        %v488 = vpop.permute.xlu0 %487
        %489 = vrot.lane.b32.xlu0 %v444, 1
        %v490 = vpop.permute.xlu0 %489
        %491 = vrot.lane.b32.xlu0 %v448, 1
        %v492 = vpop.permute.xlu0 %491
        %493 = vrot.lane.b32.xlu0 %v452, 1
        %v494 = vpop.permute.xlu0 %493
        %495 = vrot.lane.b32.xlu0 %v456, 1
        %v496 = vpop.permute.xlu0 %495
        %497 = vrot.lane.b32.xlu0 %v460, 1
        %v498 = vpop.permute.xlu0 %497
        %499 = vrot.lane.b32.xlu0 %v464, 1
        %v500 = vpop.permute.xlu0 %499
        %501 = vrot.lane.b32.xlu0 %v468, 1
        %v502 = vpop.permute.xlu0 %501
        %503 = vrot.lane.b32.xlu0 %v441, 1
        %v504 = vpop.permute.xlu0 %503
        %505 = vrot.lane.b32.xlu0 %v445, 1
        %v506 = vpop.permute.xlu0 %505
        %507 = vrot.lane.b32.xlu0 %v449, 1
        %v508 = vpop.permute.xlu0 %507
        %509 = vrot.lane.b32.xlu0 %v453, 1
        %v510 = vpop.permute.xlu0 %509
        %511 = vrot.lane.b32.xlu0 %v457, 1
        %v512 = vpop.permute.xlu0 %511
        %513 = vrot.lane.b32.xlu0 %v461, 1
        %v514 = vpop.permute.xlu0 %513
        %515 = vrot.lane.b32.xlu0 %v465, 1
        %v516 = vpop.permute.xlu0 %515
        %517 = vrot.lane.b32.xlu0 %v469, 1
        %v518 = vpop.permute.xlu0 %517
        %519 = vrot.lane.b32.xlu0 %v442, 1
        %v520 = vpop.permute.xlu0 %519
        %521 = vrot.lane.b32.xlu0 %v446, 1
        %v522 = vpop.permute.xlu0 %521
        %523 = vrot.lane.b32.xlu0 %v450, 1
        %v524 = vpop.permute.xlu0 %523
        %525 = vrot.lane.b32.xlu0 %v454, 1
        %v526 = vpop.permute.xlu0 %525
        %527 = vrot.lane.b32.xlu0 %v458, 1
        %v528 = vpop.permute.xlu0 %527
        %529 = vrot.lane.b32.xlu0 %v462, 1
        %v530 = vpop.permute.xlu0 %529
        %531 = vrot.lane.b32.xlu0 %v466, 1
        %v532 = vpop.permute.xlu0 %531
        %533 = vrot.lane.b32.xlu0 %v470, 1
        %v534 = vpop.permute.xlu0 %533
        %v535 = vlaneseq
        %v536 = vand.u32 %v535, 127
        %vm537 = vcmp.lt.s32.totalorder %v536, 1
        %v538 = vsel %vm537, %v504, %v520
        %v539 = vsel %vm537, %v506, %v522
        %v540 = vsel %vm537, %v508, %v524
        %v541 = vsel %vm537, %v510, %v526
        %v542 = vsel %vm537, %v512, %v528
        %v543 = vsel %vm537, %v514, %v530
        %v544 = vsel %vm537, %v516, %v532
        %v545 = vsel %vm537, %v518, %v534
        %v546 = vsel %vm537, %v488, %v504
        %v547 = vsel %vm537, %v490, %v506
        %v548 = vsel %vm537, %v492, %v508
        %v549 = vsel %vm537, %v494, %v510
        %v550 = vsel %vm537, %v496, %v512
        %v551 = vsel %vm537, %v498, %v514
        %v552 = vsel %vm537, %v500, %v516
        %v553 = vsel %vm537, %v502, %v518
        %v554 = vsel %vm537, %v472, %v488
        %v555 = vsel %vm537, %v474, %v490
        %v556 = vsel %vm537, %v476, %v492
        %v557 = vsel %vm537, %v478, %v494
        %v558 = vsel %vm537, %v480, %v496
        %v559 = vsel %vm537, %v482, %v498
        %v560 = vsel %vm537, %v484, %v500
        %v561 = vsel %vm537, %v486, %v502
        %v562 = vsel %vm537, %v520, %v472
        %v563 = vsel %vm537, %v522, %v474
        %v564 = vsel %vm537, %v524, %v476
        %v565 = vsel %vm537, %v526, %v478
        %v566 = vsel %vm537, %v528, %v480
        %v567 = vsel %vm537, %v530, %v482
        %v568 = vsel %vm537, %v532, %v484
        %v569 = vsel %vm537, %v534, %v486
        %v570 = vadd.f32 %v375, %v562
        %v571 = vadd.f32 %v376, %v554
        %v572 = vadd.f32 %v377, %v546
        %v573 = vadd.f32 %v378, %v538
        %v574 = vadd.f32 %v379, %v563
        %v575 = vadd.f32 %v380, %v555
        %v576 = vadd.f32 %v381, %v547
        %v577 = vadd.f32 %v382, %v539
        %v578 = vadd.f32 %v383, %v564
        %v579 = vadd.f32 %v384, %v556
        %v580 = vadd.f32 %v385, %v548
        %v581 = vadd.f32 %v386, %v540
        %v582 = vadd.f32 %v387, %v565
        %v583 = vadd.f32 %v388, %v557
        %v584 = vadd.f32 %v389, %v549
        %v585 = vadd.f32 %v390, %v541
        %v586 = vadd.f32 %v391, %v566
        %v587 = vadd.f32 %v392, %v558
        %v588 = vadd.f32 %v393, %v550
        %v589 = vadd.f32 %v394, %v542
        %v590 = vadd.f32 %v395, %v567
        %v591 = vadd.f32 %v396, %v559
        %v592 = vadd.f32 %v397, %v551
        %v593 = vadd.f32 %v398, %v543
        %v594 = vadd.f32 %v399, %v568
        %v595 = vadd.f32 %v400, %v560
        %v596 = vadd.f32 %v401, %v552
        %v597 = vadd.f32 %v402, %v544
        %v598 = vadd.f32 %v403, %v569
        %v599 = vadd.f32 %v404, %v561
        %v600 = vadd.f32 %v405, %v553
        %v601 = vadd.f32 %v406, %v545
        %v602 = vld [vmem:[#allocation8] sm:$0xff]
        %v603 = vld [vmem:[#allocation8 + $0x8] sm:$0xff]
        %v604 = vld [vmem:[#allocation8 + $0x10] sm:$0xff]
        %v605 = vld [vmem:[#allocation8 + $0x18] sm:$0xff]
        %v606 = vld [vmem:[#allocation8 + $0x20] sm:$0xff]
        %v607 = vld [vmem:[#allocation8 + $0x28] sm:$0xff]
        %v608 = vld [vmem:[#allocation8 + $0x30] sm:$0xff]
        %v609 = vld [vmem:[#allocation8 + $0x38] sm:$0xff]
        %v610 = vld [vmem:[#allocation8 + $0x40] sm:$0xff]
        %v611 = vld [vmem:[#allocation8 + $0x48] sm:$0xff]
        %v612 = vld [vmem:[#allocation8 + $0x50] sm:$0xff]
        %v613 = vld [vmem:[#allocation8 + $0x58] sm:$0xff]
        %v614 = vld [vmem:[#allocation8 + $0x60] sm:$0xff]
        %v615 = vld [vmem:[#allocation8 + $0x68] sm:$0xff]
        %v616 = vld [vmem:[#allocation8 + $0x70] sm:$0xff]
        %v617 = vld [vmem:[#allocation8 + $0x78] sm:$0xff]
        %v618 = vld [vmem:[#allocation8 + $0x80] sm:$0xff]
        %v619 = vld [vmem:[#allocation8 + $0x88] sm:$0xff]
        %v620 = vld [vmem:[#allocation8 + $0x90] sm:$0xff]
        %v621 = vld [vmem:[#allocation8 + $0x98] sm:$0xff]
        %v622 = vld [vmem:[#allocation8 + $0xa0] sm:$0xff]
        %v623 = vld [vmem:[#allocation8 + $0xa8] sm:$0xff]
        %v624 = vld [vmem:[#allocation8 + $0xb0] sm:$0xff]
        %v625 = vld [vmem:[#allocation8 + $0xb8] sm:$0xff]
        %v626 = vld [vmem:[#allocation8 + $0xc0] sm:$0xff]
        %v627 = vld [vmem:[#allocation8 + $0xc8] sm:$0xff]
        %v628 = vld [vmem:[#allocation8 + $0xd0] sm:$0xff]
        %v629 = vld [vmem:[#allocation8 + $0xd8] sm:$0xff]
        %v630 = vld [vmem:[#allocation8 + $0xe0] sm:$0xff]
        %v631 = vld [vmem:[#allocation8 + $0xe8] sm:$0xff]
        %v632 = vld [vmem:[#allocation8 + $0xf0] sm:$0xff]
        %v633 = vld [vmem:[#allocation8 + $0xf8] sm:$0xff]
        %v634 = vmul.f32 %v311, %v602
        %v635 = vmul.f32 %v312, %v603
        %v636 = vmul.f32 %v313, %v604
        %v637 = vmul.f32 %v314, %v605
        %v638 = vmul.f32 %v315, %v606
        %v639 = vmul.f32 %v316, %v607
        %v640 = vmul.f32 %v317, %v608
        %v641 = vmul.f32 %v318, %v609
        %v642 = vmul.f32 %v319, %v610
        %v643 = vmul.f32 %v320, %v611
        %v644 = vmul.f32 %v321, %v612
        %v645 = vmul.f32 %v322, %v613
        %v646 = vmul.f32 %v323, %v614
        %v647 = vmul.f32 %v324, %v615
        %v648 = vmul.f32 %v325, %v616
        %v649 = vmul.f32 %v326, %v617
        %v650 = vmul.f32 %v327, %v618
        %v651 = vmul.f32 %v328, %v619
        %v652 = vmul.f32 %v329, %v620
        %v653 = vmul.f32 %v330, %v621
        %v654 = vmul.f32 %v331, %v622
        %v655 = vmul.f32 %v332, %v623
        %v656 = vmul.f32 %v333, %v624
        %v657 = vmul.f32 %v334, %v625
        %v658 = vmul.f32 %v335, %v626
        %v659 = vmul.f32 %v336, %v627
        %v660 = vmul.f32 %v337, %v628
        %v661 = vmul.f32 %v338, %v629
        %v662 = vmul.f32 %v339, %v630
        %v663 = vmul.f32 %v340, %v631
        %v664 = vmul.f32 %v341, %v632
        %v665 = vmul.f32 %v342, %v633
        %666 = vrot.lane.b32.xlu0 %v634, 127
        %v667 = vpop.permute.xlu0 %666
        %668 = vrot.lane.b32.xlu0 %v638, 127
        %v669 = vpop.permute.xlu0 %668
        %670 = vrot.lane.b32.xlu0 %v642, 127
        %v671 = vpop.permute.xlu0 %670
        %672 = vrot.lane.b32.xlu0 %v646, 127
        %v673 = vpop.permute.xlu0 %672
        %674 = vrot.lane.b32.xlu0 %v650, 127
        %v675 = vpop.permute.xlu0 %674
        %676 = vrot.lane.b32.xlu0 %v654, 127
        %v677 = vpop.permute.xlu0 %676
        %678 = vrot.lane.b32.xlu0 %v658, 127
        %v679 = vpop.permute.xlu0 %678
        %680 = vrot.lane.b32.xlu0 %v662, 127
        %v681 = vpop.permute.xlu0 %680
        %682 = vrot.lane.b32.xlu0 %v635, 127
        %v683 = vpop.permute.xlu0 %682
        %684 = vrot.lane.b32.xlu0 %v639, 127
        %v685 = vpop.permute.xlu0 %684
        %686 = vrot.lane.b32.xlu0 %v643, 127
        %v687 = vpop.permute.xlu0 %686
        %688 = vrot.lane.b32.xlu0 %v647, 127
        %v689 = vpop.permute.xlu0 %688
        %690 = vrot.lane.b32.xlu0 %v651, 127
        %v691 = vpop.permute.xlu0 %690
        %692 = vrot.lane.b32.xlu0 %v655, 127
        %v693 = vpop.permute.xlu0 %692
        %694 = vrot.lane.b32.xlu0 %v659, 127
        %v695 = vpop.permute.xlu0 %694
        %696 = vrot.lane.b32.xlu0 %v663, 127
        %v697 = vpop.permute.xlu0 %696
        %698 = vrot.lane.b32.xlu0 %v636, 127
        %v699 = vpop.permute.xlu0 %698
        %700 = vrot.lane.b32.xlu0 %v640, 127
        %v701 = vpop.permute.xlu0 %700
        %702 = vrot.lane.b32.xlu0 %v644, 127
        %v703 = vpop.permute.xlu0 %702
        %704 = vrot.lane.b32.xlu0 %v648, 127
        %v705 = vpop.permute.xlu0 %704
        %706 = vrot.lane.b32.xlu0 %v652, 127
        %v707 = vpop.permute.xlu0 %706
        %708 = vrot.lane.b32.xlu0 %v656, 127
        %v709 = vpop.permute.xlu0 %708
        %710 = vrot.lane.b32.xlu0 %v660, 127
        %v711 = vpop.permute.xlu0 %710
        %712 = vrot.lane.b32.xlu0 %v664, 127
        %v713 = vpop.permute.xlu0 %712
        %714 = vrot.lane.b32.xlu0 %v637, 127
        %v715 = vpop.permute.xlu0 %714
        %716 = vrot.lane.b32.xlu0 %v641, 127
        %v717 = vpop.permute.xlu0 %716
        %718 = vrot.lane.b32.xlu0 %v645, 127
        %v719 = vpop.permute.xlu0 %718
        %720 = vrot.lane.b32.xlu0 %v649, 127
        %v721 = vpop.permute.xlu0 %720
        %722 = vrot.lane.b32.xlu0 %v653, 127
        %v723 = vpop.permute.xlu0 %722
        %724 = vrot.lane.b32.xlu0 %v657, 127
        %v725 = vpop.permute.xlu0 %724
        %726 = vrot.lane.b32.xlu0 %v661, 127
        %v727 = vpop.permute.xlu0 %726
        %728 = vrot.lane.b32.xlu0 %v665, 127
        %v729 = vpop.permute.xlu0 %728
        %vm730 = vcmp.lt.s32.totalorder %v536, 127
        %v731 = vsel %vm730, %v699, %v715
        %v732 = vsel %vm730, %v701, %v717
        %v733 = vsel %vm730, %v703, %v719
        %v734 = vsel %vm730, %v705, %v721
        %v735 = vsel %vm730, %v707, %v723
        %v736 = vsel %vm730, %v709, %v725
        %v737 = vsel %vm730, %v711, %v727
        %v738 = vsel %vm730, %v713, %v729
        %v739 = vsel %vm730, %v683, %v699
        %v740 = vsel %vm730, %v685, %v701
        %v741 = vsel %vm730, %v687, %v703
        %v742 = vsel %vm730, %v689, %v705
        %v743 = vsel %vm730, %v691, %v707
        %v744 = vsel %vm730, %v693, %v709
        %v745 = vsel %vm730, %v695, %v711
        %v746 = vsel %vm730, %v697, %v713
        %v747 = vsel %vm730, %v667, %v683
        %v748 = vsel %vm730, %v669, %v685
        %v749 = vsel %vm730, %v671, %v687
        %v750 = vsel %vm730, %v673, %v689
        %v751 = vsel %vm730, %v675, %v691
        %v752 = vsel %vm730, %v677, %v693
        %v753 = vsel %vm730, %v679, %v695
        %v754 = vsel %vm730, %v681, %v697
        %v755 = vsel %vm730, %v715, %v667
        %v756 = vsel %vm730, %v717, %v669
        %v757 = vsel %vm730, %v719, %v671
        %v758 = vsel %vm730, %v721, %v673
        %v759 = vsel %vm730, %v723, %v675
        %v760 = vsel %vm730, %v725, %v677
        %v761 = vsel %vm730, %v727, %v679
        %v762 = vsel %vm730, %v729, %v681
        %v763 = vadd.f32 %v570, %v747
        %v764 = vadd.f32 %v571, %v739
        %v765 = vadd.f32 %v572, %v731
        %v766 = vadd.f32 %v573, %v755
        %v767 = vadd.f32 %v574, %v748
        %v768 = vadd.f32 %v575, %v740
        %v769 = vadd.f32 %v576, %v732
        %v770 = vadd.f32 %v577, %v756
        %v771 = vadd.f32 %v578, %v749
        %v772 = vadd.f32 %v579, %v741
        %v773 = vadd.f32 %v580, %v733
        %v774 = vadd.f32 %v581, %v757
        %v775 = vadd.f32 %v582, %v750
        %v776 = vadd.f32 %v583, %v742
        %v777 = vadd.f32 %v584, %v734
        %v778 = vadd.f32 %v585, %v758
        %v779 = vadd.f32 %v586, %v751
        %v780 = vadd.f32 %v587, %v743
        %v781 = vadd.f32 %v588, %v735
        %v782 = vadd.f32 %v589, %v759
        %v783 = vadd.f32 %v590, %v752
        %v784 = vadd.f32 %v591, %v744
        %v785 = vadd.f32 %v592, %v736
        %v786 = vadd.f32 %v593, %v760
        %v787 = vadd.f32 %v594, %v753
        %v788 = vadd.f32 %v595, %v745
        %v789 = vadd.f32 %v596, %v737
        %v790 = vadd.f32 %v597, %v761
        %v791 = vadd.f32 %v598, %v754
        %v792 = vadd.f32 %v599, %v746
        %v793 = vadd.f32 %v600, %v738
        %v794 = vadd.f32 %v601, %v762
        %795 = vst [vmem:[%s305] sm:$0xff] %v763
        %796 = vst [vmem:[%s305 + $0x8] sm:$0xff] %v764
        %797 = vst [vmem:[%s305 + $0x10] sm:$0xff] %v765
        %798 = vst [vmem:[%s305 + $0x18] sm:$0xff] %v766
        %799 = vst [vmem:[%s305 + $0x20] sm:$0xff] %v767
        %800 = vst [vmem:[%s305 + $0x28] sm:$0xff] %v768
        %801 = vst [vmem:[%s305 + $0x30] sm:$0xff] %v769
        %802 = vst [vmem:[%s305 + $0x38] sm:$0xff] %v770
        %803 = vst [vmem:[%s305 + $0x40] sm:$0xff] %v771
        %804 = vst [vmem:[%s305 + $0x48] sm:$0xff] %v772
        %805 = vst [vmem:[%s305 + $0x50] sm:$0xff] %v773
        %806 = vst [vmem:[%s305 + $0x58] sm:$0xff] %v774
        %807 = vst [vmem:[%s305 + $0x60] sm:$0xff] %v775
        %808 = vst [vmem:[%s305 + $0x68] sm:$0xff] %v776
        %809 = vst [vmem:[%s305 + $0x70] sm:$0xff] %v777
        %810 = vst [vmem:[%s305 + $0x78] sm:$0xff] %v778
        %811 = vst [vmem:[%s305 + $0x80] sm:$0xff] %v779
        %812 = vst [vmem:[%s305 + $0x88] sm:$0xff] %v780
        %813 = vst [vmem:[%s305 + $0x90] sm:$0xff] %v781
        %814 = vst [vmem:[%s305 + $0x98] sm:$0xff] %v782
        %815 = vst [vmem:[%s305 + $0xa0] sm:$0xff] %v783
        %816 = vst [vmem:[%s305 + $0xa8] sm:$0xff] %v784
        %817 = vst [vmem:[%s305 + $0xb0] sm:$0xff] %v785
        %818 = vst [vmem:[%s305 + $0xb8] sm:$0xff] %v786
        %819 = vst [vmem:[%s305 + $0xc0] sm:$0xff] %v787
        %820 = vst [vmem:[%s305 + $0xc8] sm:$0xff] %v788
        %821 = vst [vmem:[%s305 + $0xd0] sm:$0xff] %v789
        %822 = vst [vmem:[%s305 + $0xd8] sm:$0xff] %v790
        %823 = vst [vmem:[%s305 + $0xe0] sm:$0xff] %v791
        %824 = vst [vmem:[%s305 + $0xe8] sm:$0xff] %v792
        %825 = vst [vmem:[%s305 + $0xf0] sm:$0xff] %v793
        %826 = vst [vmem:[%s305 + $0xf8] sm:$0xff] %v794
        %s827 = sand.u32 %s151, 1
        %s828 = scalar_lea.sflag [#allocation4], %s827
        %s829 = sand.u32 %s151, 1
        %s830 = smul.addr %s829, 256
        %s831 = scalar_lea.vmem [#allocation10], %s830
        // Predicated region
        $region53: #{tpu_custom_call.1} parent=35 // pred_check
          %p832 = pneg %p161
        $region54: #{tpu_custom_call.1} parent=35 // pred_check_branch
          %834 = sbr.rel (%p832) target = $region56
        $region55: #{tpu_custom_call.1} parent=35 // pred_region
          %s835 = smul.u32 8, %s27
          %s837 = ssub.s32 4096, 4096
          %838 = vsyncadd %s828, %s837
          %s839 = smul.addr %s835, 4
          %s840 = smul.addr %s28, 32
          %s841 = sadd.s32 %s839, %s840
          %s842 = smul.addr %s841, 128
          %s843 = scalar_lea.hbm %s4, %s842
          %s844 = sshll.u32 %s831, 4
          %s845 = int_to_ptr.vmem [resolvable:$true] %s844
          %850 = dma.vmem_to_hbm [thread:$0]  %s845, 4096, %s843, %s828, 512, 512, 32
        $region56: #{tpu_custom_call.1} parent=35 // pred_fallthru
          _
      $region36: #{tpu_custom_call.1} parent=5 // pred_fallthru
        _
      %p851 = scmp.le.s32.totalorder 2, %s18
      // Predicated region
      $region57: #{tpu_custom_call.1} parent=5 // pred_check
        %p852 = pneg %p851
      $region58: #{tpu_custom_call.1} parent=5 // pred_check_branch
        %854 = sbr.rel (%p852) target = $region60
      $region59: #{tpu_custom_call.1} parent=5 // pred_region
        %s855 = ssub.s32 %s18, 2
        // Predicated region
        $region61: #{tpu_custom_call.1} parent=59 // pred_check
          %p856 = pneg %p167
        $region62: #{tpu_custom_call.1} parent=59 // pred_check_branch
          %858 = sbr.rel (%p856) target = $region64
        $region63: #{tpu_custom_call.1} parent=59 // pred_region
          %s859 = sand.u32 %s152, 1
          %s860 = scalar_lea.sflag [#allocation4], %s859
          %s861 = sand.u32 %s152, 1
          %s862 = smul.addr %s861, 256
          %s863 = scalar_lea.vmem [#allocation10], %s862
          %864 = dma.done %s860, 4096
        $region64: #{tpu_custom_call.1} parent=59 // pred_fallthru
          _
      $region60: #{tpu_custom_call.1} parent=5 // pred_fallthru
        _
    $region6: #{tpu_custom_call.1} parent=1 // loop_footer
      %s22 = sadd.s32 1, %s18
    $region7: #{tpu_custom_call.1} parent=1 // loop_footer_branch
      %17 = sbr.rel target = $region3
    $region8: #{tpu_custom_call.1} parent=1 // loop_exit
      _
    %865 = vsyncpa [#allocation3], 1
    %s866 = scalar_lea.sflag [#allocation3], 1
    %867 = vsyncpa %s866, 1
    %868 = vsyncpa [#allocation6], 1
    %869 = vsyncpa [#allocation9], 1
    %870 = vsyncpa [#allocation4], 1
    %s871 = scalar_lea.sflag [#allocation4], 1
    %872 = vsyncpa %s871, 1

</llo_original>
